<compile_context>
chip_gen: v7x
topology: tpu7x:2x2x1
jax: 0.10.0
libtpu: 0.0.40
codegen_flags: <defaults>
</compile_context>

<pallas_src>
import functools

import jax
import jax.numpy as jnp
from jax import lax
from jax.experimental import pallas as pl
from jax.experimental.pallas import tpu as pltpu

_LANES = 128
_SUBLANES = 8
_CHUNK_ROWS = 512            # rows processed per in-kernel chunk (bounds temporaries)
_MAX_BLOCK_ROWS = 8192       # 4 MiB f32 tile; comfortable on every generation
_TARGET_STEP_SECONDS = 3.5e-6  # amortize ~0.35 us/step pipeline overhead


def _tpu_params():
    """Best-effort (physical VMEM bytes, HBM GB/s, #TensorCores) for this host."""
    phys_vmem, hbm_gbps, num_tc = 64 << 20, 1000.0, 1  # conservative defaults
    try:
        kind = jax.devices()[0].device_kind.lower()
    except Exception:
        kind = ""
    if "v5" in kind and ("lite" in kind or "v5e" in kind):
        phys_vmem, hbm_gbps, num_tc = 128 << 20, 820.0, 1
    elif "v5" in kind:  # v5p (megacore)
        phys_vmem, hbm_gbps, num_tc = 128 << 20, 2700.0, 2
    elif "v6" in kind:
        phys_vmem, hbm_gbps, num_tc = 128 << 20, 1400.0, 1
    elif "v7" in kind:
        phys_vmem, hbm_gbps, num_tc = 64 << 20, 3200.0, 2
    elif "v4" in kind:
        phys_vmem, hbm_gbps, num_tc = 128 << 20, 1200.0, 2
    try:
        info = pltpu.get_tpu_info()
        v = getattr(info, "vmem_capacity_bytes", None)
        if v:
            phys_vmem = int(v)
        for attr in ("num_tensorcores", "tensorcore_count", "num_cores"):
            c = getattr(info, attr, None)
            if c:
                num_tc = int(c)
                break
    except Exception:
        pass
    return phys_vmem, hbm_gbps, num_tc


def _plan_tiles(rows, itemsize, streams, block_rows=None):
    """Pick (block_rows, chunk_rows, vmem_limit_bytes, num_tensorcores)."""
    phys_vmem, hbm_gbps, num_tc = _tpu_params()
    cap = max(16 << 20, int(phys_vmem * 0.7))  # never request more than ~70% of VMEM
    if block_rows is None:
        # Size the tile so one grid step moves >= ~3.5 us of HBM traffic.
        target_bytes = _TARGET_STEP_SECONDS * hbm_gbps * 1e9
        br = int(target_bytes // (streams * _LANES * itemsize))
    else:
        br = int(block_rows)
    # VMEM budget: streams arrays x 2 pipeline buffers per tile + slack for temps.
    max_rows_vmem = (cap - (4 << 20)) // (streams * 2 * _LANES * itemsize)
    br = max(_SUBLANES, min(br, _MAX_BLOCK_ROWS, int(max_rows_vmem), rows))
    br = (br // _SUBLANES) * _SUBLANES
    chunk = min(br, _CHUNK_ROWS)
    br = max(chunk, (br // chunk) * chunk)   # block is a whole number of chunks
    tile_bytes = br * _LANES * itemsize
    vmem_limit = int(min(cap, max(16 << 20, streams * 2 * tile_bytes + (4 << 20))))
    return br, chunk, vmem_limit, num_tc


def _block_sq_sum(x_ref, y_ref, *, br, chunk, base_row, rows, masked):
    """(8,128) f32 partial sum of (x-y)^2 over this (br,128) block, chunked."""
    nchunks = br // chunk

    def body(c, carry):
        r0 = pl.multiple_of(c * chunk, chunk)
        d = (x_ref[pl.ds(r0, chunk), :].astype(jnp.float32)
             - y_ref[pl.ds(r0, chunk), :].astype(jnp.float32))
        dd = d * d
        if masked:
            # (chunk,1) iota broadcast in the select; keep as select (pad may be NaN).
            row = base_row + r0 + lax.broadcasted_iota(jnp.int32, (chunk, 1), 0)
            dd = jnp.where(row < rows, dd, 0.0)
        return carry + dd.reshape(chunk // _SUBLANES, _SUBLANES, _LANES).sum(axis=0)

    return lax.fori_loop(0, nchunks, body,
                         jnp.zeros((_SUBLANES, _LANES), jnp.float32),
                         unroll=nchunks <= 8)


def _mse_sum_kernel_1tc(x_ref, y_ref, o_ref, acc_ref, *, br, chunk, rows, needs_mask):
    """Single-TC reduction: resident (8,128) VMEM accumulator + SMEM scalar out."""
    k = pl.program_id(0)
    nblk = pl.num_programs(0)

    @pl.when(k == 0)
    def _():
        acc_ref[...] = jnp.zeros_like(acc_ref)

    base_row = k * br
    if needs_mask:
        # Only the final (possibly overhanging) block pays for the row mask.
        @pl.when(k == nblk - 1)
        def _():
            acc_ref[...] += _block_sq_sum(x_ref, y_ref, br=br, chunk=chunk,
                                          base_row=base_row, rows=rows, masked=True)

        @pl.when(k < nblk - 1)
        def _():
            acc_ref[...] += _block_sq_sum(x_ref, y_ref, br=br, chunk=chunk,
                                          base_row=base_row, rows=rows, masked=False)
    else:
        acc_ref[...] += _block_sq_sum(x_ref, y_ref, br=br, chunk=chunk,
                                      base_row=base_row, rows=rows, masked=False)

    # Fold the final cross-lane reduce into the kernel (XLU slot is idle); the
    # host only consumes one f32 scalar -> no extra XLA reduce dispatch.
    @pl.when(k == nblk - 1)
    def _():
        o_ref[0] = jnp.sum(acc_ref[...])


def _mse_sum_kernel_2tc(x_ref, y_ref, o_ref, *, br, chunk, bpc, num_blocks, rows,
                        needs_mask):
    """Multi-TC reduction: per-split resident (8,128) accumulator in the output."""
    i = pl.program_id(0)
    k = pl.program_id(1)

    @pl.when(k == 0)
    def _():
        o_ref[...] = jnp.zeros_like(o_ref)

    logical_block = i * bpc + k
    base_row = logical_block * br
    if needs_mask:
        @pl.when(logical_block >= num_blocks - 1)
        def _():
            o_ref[...] += _block_sq_sum(x_ref, y_ref, br=br, chunk=chunk,
                                        base_row=base_row, rows=rows, masked=True)

        @pl.when(logical_block < num_blocks - 1)
        def _():
            o_ref[...] += _block_sq_sum(x_ref, y_ref, br=br, chunk=chunk,
                                        base_row=base_row, rows=rows, masked=False)
    else:
        o_ref[...] += _block_sq_sum(x_ref, y_ref, br=br, chunk=chunk,
                                    base_row=base_row, rows=rows, masked=False)


def _mse_partial_sum(x2, y2, rows, block_rows):
    """Raw f32 sum of (x2 - y2)^2 over a lane-dense [rows, 128] slab."""
    itemsize = jnp.dtype(x2.dtype).itemsize
    br, chunk, vmem_limit, num_tc = _plan_tiles(rows, itemsize, streams=2,
                                                block_rows=block_rows)
    num_blocks = pl.cdiv(rows, br)
    n_main = rows * _LANES
    cost = pl.CostEstimate(flops=3 * n_main, transcendentals=0,
                           bytes_accessed=2 * n_main * itemsize + 1024)

    if num_tc < 2 or num_blocks < 2:
        needs_mask = num_blocks * br != rows
        kernel = functools.partial(_mse_sum_kernel_1tc, br=br, chunk=chunk,
                                   rows=rows, needs_mask=needs_mask)
        out = pl.pallas_call(
            kernel,
            out_shape=jax.ShapeDtypeStruct((1,), jnp.float32),
            grid_spec=pltpu.PrefetchScalarGridSpec(
                num_scalar_prefetch=0,
                grid=(num_blocks,),
                in_specs=[pl.BlockSpec((br, _LANES), lambda k: (k, 0)),
                          pl.BlockSpec((br, _LANES), lambda k: (k, 0))],
                out_specs=pl.BlockSpec(memory_space=pltpu.MemorySpace.SMEM),
                scratch_shapes=[pltpu.VMEM((_SUBLANES, _LANES), jnp.float32)],
            ),
            compiler_params=pltpu.CompilerParams(
                dimension_semantics=("arbitrary",),
                vmem_limit_bytes=vmem_limit),
            cost_estimate=cost,
        )(x2, y2)
        return out[0]

    # Multi-TC chips (v7x / v5p / v4): leading size-2 "parallel" axis shards the
    # block range across TensorCores; each split owns its resident (8,128) block.
    num_splits = 2
    bpc = pl.cdiv(num_blocks, num_splits)
    needs_mask = (num_splits * bpc * br) != rows

    def in_map(i, k):
        # Clamp so an overhanging split never indexes a fully-OOB block; the
        # in-kernel logical-row mask zeroes any duplicated contribution.
        return (jnp.minimum(i * bpc + k, num_blocks - 1), 0)

    kernel = functools.partial(_mse_sum_kernel_2tc, br=br, chunk=chunk, bpc=bpc,
                               num_blocks=num_blocks, rows=rows,
                               needs_mask=needs_mask)
    partials = pl.pallas_call(
        kernel,
        out_shape=jax.ShapeDtypeStruct((num_splits * _SUBLANES, _LANES), jnp.float32),
        grid_spec=pltpu.PrefetchScalarGridSpec(
            num_scalar_prefetch=0,
            grid=(num_splits, bpc),
            in_specs=[pl.BlockSpec((br, _LANES), in_map),
                      pl.BlockSpec((br, _LANES), in_map)],
            out_specs=pl.BlockSpec((_SUBLANES, _LANES), lambda i, k: (i, 0)),
        ),
        compiler_params=pltpu.CompilerParams(
            dimension_semantics=("parallel", "arbitrary"),
            vmem_limit_bytes=vmem_limit),
        cost_estimate=cost,
    )(x2, y2)
    return jnp.sum(partials)


def _mse_reduce(x, y, reduction, block_rows):
    n = x.size
    xf = jnp.ravel(x)
    yf = jnp.ravel(y)
    main = (n // _LANES) * _LANES
    rows = main // _LANES
    if rows < _SUBLANES:       # tiny input: a kernel launch isn't worth it
        main, rows = 0, 0

    total = jnp.float32(0.0)
    if rows > 0:
        if main == n:          # zero-copy reshape: no padding / slicing copies
            x2 = xf.reshape(rows, _LANES)
            y2 = yf.reshape(rows, _LANES)
        else:                  # ragged: kernel on the 128-aligned prefix only
            x2 = lax.slice(xf, (0,), (main,)).reshape(rows, _LANES)
            y2 = lax.slice(yf, (0,), (main,)).reshape(rows, _LANES)
        total = total + _mse_partial_sum(x2, y2, rows, block_rows)
    if main != n:              # ragged tail (< 128 elements) in plain JAX
        xt = lax.slice(xf, (main,), (n,)).astype(jnp.float32)
        yt = lax.slice(yf, (main,), (n,)).astype(jnp.float32)
        d = xt - yt
        total = total + jnp.sum(d * d)

    if reduction == "mean":
        total = total / n
    return total.astype(x.dtype)


def _mse_none_kernel(x_ref, y_ref, o_ref, *, br, chunk):
    nchunks = br // chunk

    def body(c, carry):
        r0 = pl.multiple_of(c * chunk, chunk)
        d = (x_ref[pl.ds(r0, chunk), :].astype(jnp.float32)
             - y_ref[pl.ds(r0, chunk), :].astype(jnp.float32))
        o_ref[pl.ds(r0, chunk), :] = (d * d).astype(o_ref.dtype)
        return carry

    lax.fori_loop(0, nchunks, body, 0, unroll=nchunks <= 8)


def _mse_none(x, y, block_rows):
    n = x.size
    rows = n // _LANES
    if n % _LANES != 0 or rows < _SUBLANES:
        # Ragged / tiny case: a lane-dense kernel would need a full padding copy
        # of both inputs (more HBM traffic than the op itself) -> plain JAX.
        d = x.astype(jnp.float32) - y.astype(jnp.float32)
        return (d * d).astype(x.dtype)

    itemsize = jnp.dtype(x.dtype).itemsize
    br, chunk, vmem_limit, _ = _plan_tiles(rows, itemsize, streams=3,
                                           block_rows=block_rows)
    x2 = jnp.ravel(x).reshape(rows, _LANES)
    y2 = jnp.ravel(y).reshape(rows, _LANES)

    kernel = functools.partial(_mse_none_kernel, br=br, chunk=chunk)
    out2 = pl.pallas_call(
        kernel,
        out_shape=jax.ShapeDtypeStruct((rows, _LANES), x.dtype),
        grid_spec=pltpu.PrefetchScalarGridSpec(
            num_scalar_prefetch=0,
            grid=(pl.cdiv(rows, br),),
            in_specs=[pl.BlockSpec((br, _LANES), lambda i: (i, 0)),
                      pl.BlockSpec((br, _LANES), lambda i: (i, 0))],
            out_specs=pl.BlockSpec((br, _LANES), lambda i: (i, 0)),
        ),
        compiler_params=pltpu.CompilerParams(
            dimension_semantics=("parallel",),
            vmem_limit_bytes=vmem_limit),
    )(x2, y2)
    return out2.reshape(x.shape)   # zero-copy: no padding was added


def mse_loss(x, y, reduction="mean", block_rows=None):
    """MSE loss between x and y (same shape). reduction in {'mean','sum','none'}."""
    assert x.shape == y.shape, "x and y must have the same shape"
    assert reduction in ("mean", "sum", "none")
    if reduction == "none":
        return _mse_none(x, y, block_rows)
    return _mse_reduce(x, y, reduction, block_rows)


class MSELoss:
    """Mirrors alpine.losses.loss_functions.MSELoss forward semantics."""

    def __init__(self, reduction="mean"):
        self.reduction = reduction

    def __call__(self, x, y):
        x_output = x.get("output", None) if isinstance(x, dict) else x
        assert x_output is not None, (
            "Output not found in the packet. Please return the output as a "
            "dict object with keys 'output' and others"
        )
        if isinstance(y, dict):
            y_signal = y.get("signal", None)
        else:
            y_signal = y
        assert y_signal is not None, (
            "Output not found in the packet. Please return the output as a "
            "dict object with keys 'output' and others"
        )
        return mse_loss(x_output, y_signal, reduction=self.reduction)


if __name__ == "__main__":
    key = jax.random.PRNGKey(0)
    k1, k2, k3, k4 = jax.random.split(key, 4)
    # Small NCHW-style shapes: batch=2, channels=4, spatial=16x16
    x_out = jax.random.normal(k1, (2, 4, 16, 16), dtype=jnp.float32)
    y_sig = jax.random.normal(k2, (2, 4, 16, 16), dtype=jnp.float32)

    # reduction='mean' (module default / spec path)
    loss = MSELoss(reduction="mean")({"output": x_out}, {"signal": y_sig})
    loss = jax.block_until_ready(loss)
    ref = jnp.mean((x_out - y_sig) ** 2)
    assert jnp.allclose(loss, ref, rtol=1e-5, atol=1e-6), (loss, ref)

    # reduction='sum'
    loss_sum = jax.block_until_ready(
        MSELoss(reduction="sum")({"output": x_out}, y_sig)
    )
    ref_sum = jnp.sum((x_out - y_sig) ** 2)
    assert jnp.allclose(loss_sum, ref_sum, rtol=1e-5, atol=1e-3), (loss_sum, ref_sum)

    # reduction='none'
    loss_none = jax.block_until_ready(
        MSELoss(reduction="none")({"output": x_out}, y_sig)
    )
    ref_none = (x_out - y_sig) ** 2
    assert loss_none.shape == x_out.shape
    assert jnp.allclose(loss_none, ref_none, rtol=1e-5, atol=1e-6)

    # Ragged size (not a multiple of 128): kernel prefix + plain-JAX tail + mask.
    xr = jax.random.normal(k3, (3, 5, 7, 11), dtype=jnp.float32)
    yr = jax.random.normal(k4, (3, 5, 7, 11), dtype=jnp.float32)
    lr = jax.block_until_ready(mse_loss(xr, yr, reduction="mean"))
    rr = jnp.mean((xr - yr) ** 2)
    assert jnp.allclose(lr, rr, rtol=1e-5, atol=1e-6), (lr, rr)

    # Larger multi-block case: exercises chunked accumulation + edge-block mask.
    xm = jax.random.normal(k1, (8, 256, 512), dtype=jnp.float32)
    ym = jax.random.normal(k2, (8, 256, 512), dtype=jnp.float32)
    lm = jax.block_until_ready(mse_loss(xm, ym, reduction="mean"))
    rm = jnp.mean((xm - ym) ** 2)
    assert jnp.allclose(lm, rm, rtol=1e-4, atol=1e-6), (lm, rm)

    print("KERNEL_OK")
</pallas_src>

<mosaic_0001>
module attributes {stable_mosaic.version = 11 : i64} {
  func.func @_mse_sum_kernel_1tc(%arg0: i32, %arg1: memref<16x128xf32, #tpu.memory_space<vmem>>, %arg2: memref<16x128xf32, #tpu.memory_space<vmem>>, %arg3: memref<1xf32, #tpu.memory_space<smem>>, %arg4: memref<8x128xf32, #tpu.memory_space<vmem>>) attributes {dimension_semantics = [#tpu.dimension_semantics<arbitrary>], iteration_bounds = array<i64: 1>, scalar_prefetch = 0 : i64, scratch_operands = 1 : i64, tpu.core_type = #tpu.core_type<tc>, window_params = [{transform_indices = @transform_0, window_bounds = array<i64: 16, 128>}, {transform_indices = @transform_1, window_bounds = array<i64: 16, 128>}, {transform_indices = @transform_2, window_bounds = array<i64: 1>}]} {
    %c0_i32 = arith.constant 0 : i32
    %0 = arith.cmpi eq, %arg0, %c0_i32 : i32
    %1 = arith.extui %0 : i1 to i32
    %c0_i32_0 = arith.constant 0 : i32
    %2 = arith.cmpi ne, %1, %c0_i32_0 : i32
    scf.if %2 {
      %cst_10 = arith.constant 0.000000e+00 : f32
      %21 = vector.broadcast %cst_10 : f32 to vector<8x128xf32>
      %c0_11 = arith.constant 0 : index
      %c0_12 = arith.constant 0 : index
      %22 = vector.load %arg4[%c0_11, %c0_12] : memref<8x128xf32, #tpu.memory_space<vmem>>, vector<8x128xf32>
      tpu.vector_store %arg4[%c0_11, %c0_12], %21 {strides = array<i32>} : memref<8x128xf32, #tpu.memory_space<vmem>>, vector<8x128xf32>,
    } else {
    }
    %c0 = arith.constant 0 : index
    %c0_1 = arith.constant 0 : index
    %3 = vector.load %arg4[%c0, %c0_1] : memref<8x128xf32, #tpu.memory_space<vmem>>, vector<8x128xf32>
    %cst = arith.constant 0.000000e+00 : f32
    %4 = vector.broadcast %cst : f32 to vector<8x128xf32>
    %c0_i32_2 = arith.constant 0 : i32
    %c16_i32 = arith.constant 16 : i32
    %5 = arith.muli %c0_i32_2, %c16_i32 : i32
    %6 = tpu.assume_multiple %5, 16 : i32
    %7 = arith.index_cast %6 : i32 to index
    %c0_3 = arith.constant 0 : index
    %8 = vector.load %arg1[%7, %c0_3] : memref<16x128xf32, #tpu.memory_space<vmem>>, vector<16x128xf32>
    %9 = arith.index_cast %6 : i32 to index
    %c0_4 = arith.constant 0 : index
    %10 = vector.load %arg2[%9, %c0_4] : memref<16x128xf32, #tpu.memory_space<vmem>>, vector<16x128xf32>
    %11 = arith.subf %8, %10 : vector<16x128xf32>
    %12 = arith.mulf %11, %11 : vector<16x128xf32>
    %13 = vector.shape_cast %12 : vector<16x128xf32> to vector<2x8x128xf32>
    %cst_5 = arith.constant dense<0.000000e+00> : vector<8x128xf32>
    %14 = vector.multi_reduction <add>, %13, %cst_5 [0] : vector<2x8x128xf32> to vector<8x128xf32>
    %15 = arith.addf %4, %14 : vector<8x128xf32>
    %c1_i32 = arith.constant 1 : i32
    %16 = arith.addf %3, %15 : vector<8x128xf32>
    %c0_6 = arith.constant 0 : index
    %c0_7 = arith.constant 0 : index
    %17 = vector.load %arg4[%c0_6, %c0_7] : memref<8x128xf32, #tpu.memory_space<vmem>>, vector<8x128xf32>
    tpu.vector_store %arg4[%c0_6, %c0_7], %16 {strides = array<i32>} : memref<8x128xf32, #tpu.memory_space<vmem>>, vector<8x128xf32>,
    %c0_i32_8 = arith.constant 0 : i32
    %18 = arith.cmpi eq, %arg0, %c0_i32_8 : i32
    %19 = arith.extui %18 : i1 to i32
    %c0_i32_9 = arith.constant 0 : i32
    %20 = arith.cmpi ne, %19, %c0_i32_9 : i32
    scf.if %20 {
      %c0_10 = arith.constant 0 : index
      %c0_11 = arith.constant 0 : index
      %21 = vector.load %arg4[%c0_10, %c0_11] : memref<8x128xf32, #tpu.memory_space<vmem>>, vector<8x128xf32>
      %22 = vector.shape_cast %21 : vector<8x128xf32> to vector<1x8x128xf32>
      %cst_12 = arith.constant dense<0.000000e+00> : vector<1xf32>
      %23 = vector.multi_reduction <add>, %22, %cst_12 [1, 2] : vector<1x8x128xf32> to vector<1xf32>
      %24 = vector.shape_cast %23 : vector<1xf32> to vector<1x1x1xf32>
      %25 = vector.extract %24[0, 0, 0] : f32 from vector<1x1x1xf32>
      %c0_13 = arith.constant 0 : index
      %26 = memref.load %arg3[%c0_13] : memref<1xf32, #tpu.memory_space<smem>>
      memref.store %25, %arg3[%c0_13] : memref<1xf32, #tpu.memory_space<smem>>
    } else {
    }
    return
  }
  func.func @transform_0(%arg0: i32) -> (i32, i32) {
    %c0_i32 = arith.constant 0 : i32
    %c0_i32_0 = arith.constant 0 : i32
    return %arg0, %c0_i32 : i32, i32
  }
  func.func @transform_1(%arg0: i32) -> (i32, i32) {
    %c0_i32 = arith.constant 0 : i32
    %c0_i32_0 = arith.constant 0 : i32
    return %arg0, %c0_i32 : i32, i32
  }
  func.func @transform_2(%arg0: i32) -> i32 {
    %c0_i32 = arith.constant 0 : i32
    %c0_i32_0 = arith.constant 0 : i32
    return %c0_i32 : i32
  }
}

</mosaic_0001>

<llo_original>
// kernel: tpu_custom_call.1
$region0: #{tpu_custom_call.1}
  #allocation0 [shape = 'u32[]', space=smem, size = 0x4, offset = 0x4, fixed_abs, tag = 'smem constant byte address 0x4 - core index']
  #allocation1 [shape = 'u32[144,128]{1,0:T(1,128)}', space=vmem, size = 0x12000, scoped, tag = 'internal scratch']
  #allocation2 [shape = 'f32[8,128]{1,0:T(8,128)}', space=vmem, size = 0x1000, scoped, tag = 'scratch operand']
  %s0 = inlined_call_operand.hbm [shape: f32[16,128], index: 0, kind: input, shape index: {}]
  %s1 = inlined_call_operand.hbm [shape: f32[16,128], index: 1, kind: input, shape index: {}]
  %s2 = inlined_call_operand.hbm [shape: f32[1], index: 2, kind: output, shape index: {}]
  %s3 = sld [smem:[#allocation0]]
  $region34: #{tpu_custom_call.1} parent=0
    _
  %s5 = ssub.s32 1, %s3
  %s6 = scalar_select 0, %s5, %s3
  $region1: #{tpu_custom_call.1} parent=0
    #allocation3 [shape = 'u8[8192]{0}', space=vmem, size = 0x2000, scoped, tag = 'input window, operand 0, single buffered']
    #allocation4 [shape = 's32[1]{0}', space=sflag, size = 0x4, scoped, tag = 'scoped memory for tpu_custom_call.1']
    #allocation5 [shape = 's32[1]{0}', space=sflag, size = 0x4, scoped, tag = 'scoped memory for tpu_custom_call.1']
    #allocation6 [shape = 'u8[8192]{0}', space=vmem, size = 0x2000, scoped, tag = 'input window, operand 1, single buffered']
    #allocation7 [shape = 's32[1]{0}', space=sflag, size = 0x4, scoped, tag = 'scoped memory for tpu_custom_call.1']
    #allocation8 [shape = 'u8[512]{0}', space=smem, size = 0x200, scoped, tag = 'output window, operand 0, single buffered']
    %7 = vsyncpa [#allocation4], 0
    %8 = vsyncpa [#allocation7], 0
    %9 = vsyncpa [#allocation5], 0
    // Predicated region
    $region2: #{tpu_custom_call.1} parent=1 // pred_check
      _
    $region3: #{tpu_custom_call.1} parent=1 // pred_check_branch
      %11 = sbr.rel (0) target = $region5
    $region4: #{tpu_custom_call.1} parent=1 // pred_region
      %s13 = ssub.s32 256, 256
      %14 = vsyncadd [#allocation4], %s13
      %s15 = sshll.u32 [#allocation3], 4
      %s16 = int_to_ptr.vmem [resolvable:$true] %s15
      %21 = dma.hbm_to_vmem [thread:$0]  %s0, 256, %s16, [#allocation4], 128, 128, 8
    $region5: #{tpu_custom_call.1} parent=1 // pred_fallthru
      _
    // Predicated region
    $region6: #{tpu_custom_call.1} parent=1 // pred_check
      _
    $region7: #{tpu_custom_call.1} parent=1 // pred_check_branch
      %23 = sbr.rel (0) target = $region9
    $region8: #{tpu_custom_call.1} parent=1 // pred_region
      %s25 = ssub.s32 256, 256
      %26 = vsyncadd [#allocation7], %s25
      %s27 = sshll.u32 [#allocation6], 4
      %s28 = int_to_ptr.vmem [resolvable:$true] %s27
      %33 = dma.hbm_to_vmem [thread:$0]  %s1, 256, %s28, [#allocation7], 128, 128, 8
    $region9: #{tpu_custom_call.1} parent=1 // pred_fallthru
      _
    // Predicated region
    $region10: #{tpu_custom_call.1} parent=1 // pred_check
      _
    $region11: #{tpu_custom_call.1} parent=1 // pred_check_branch
      %35 = sbr.rel (0) target = $region13
    $region12: #{tpu_custom_call.1} parent=1 // pred_region
      %36 = dma.done [#allocation4], 256
    $region13: #{tpu_custom_call.1} parent=1 // pred_fallthru
      _
    // Predicated region
    $region14: #{tpu_custom_call.1} parent=1 // pred_check
      _
    $region15: #{tpu_custom_call.1} parent=1 // pred_check_branch
      %38 = sbr.rel (0) target = $region17
    $region16: #{tpu_custom_call.1} parent=1 // pred_region
      %39 = dma.done [#allocation7], 256
    $region17: #{tpu_custom_call.1} parent=1 // pred_fallthru
      _
    %p40 = scmp.eq.s32.totalorder 0, 0
    // Predicated region
    $region18: #{tpu_custom_call.1} parent=1 // pred_check
      %p41 = pneg %p40
    $region19: #{tpu_custom_call.1} parent=1 // pred_check_branch
      %43 = sbr.rel (%p41) target = $region21
    $region20: #{tpu_custom_call.1} parent=1 // pred_region
      %44 = vst [vmem:[#allocation2] sm:$0xff] 0.0
    $region21: #{tpu_custom_call.1} parent=1 // pred_fallthru
      _
    %v45 = vld [vmem:[#allocation2] sm:$0xff]
    %v46 = vld [vmem:[#allocation3] sm:$0xff]
    %v47 = vld [vmem:[#allocation3 + $0x8] sm:$0xff]
    %v48 = vld [vmem:[#allocation6] sm:$0xff]
    %v49 = vld [vmem:[#allocation6 + $0x8] sm:$0xff]
    %v50 = vsub.f32 %v46, %v48
    %v51 = vsub.f32 %v47, %v49
    %v52 = vmul.f32 %v50, %v50
    %v53 = vmul.f32 %v51, %v51
    %v54 = vadd.f32 %v52, %v53
    %v55 = vadd.f32 %v54, 0.0
    %v56 = vadd.f32 %v45, %v55
    %57 = vst [vmem:[#allocation2] sm:$0xff] %v56
    // Predicated region
    $region22: #{tpu_custom_call.1} parent=1 // pred_check
      %p58 = pneg %p40
    $region23: #{tpu_custom_call.1} parent=1 // pred_check_branch
      %60 = sbr.rel (%p58) target = $region25
    $region24: #{tpu_custom_call.1} parent=1 // pred_region
      %v61 = vld [vmem:[#allocation2] sm:$0xff]
      %62 = vadd.xlane.f32.xlu0 %v61
      %v63 = vpop.xlane.xlu0 %62
      %v64 = vrot.slane %v63, 4
      %v65 = vadd.f32 %v63, %v64
      %v66 = vrot.slane %v65, 2
      %v67 = vadd.f32 %v65, %v66
      %v68 = vrot.slane %v67, 1
      %v69 = vadd.f32 %v67, %v68
      %s70 = vtos %v69
      %s71 = scalar_lea.smem [#allocation8], 0
      %72 = sst [smem:[%s71]] %s70
    $region25: #{tpu_custom_call.1} parent=1 // pred_fallthru
      _
    // Predicated region
    $region26: #{tpu_custom_call.1} parent=1 // pred_check
      _
    $region27: #{tpu_custom_call.1} parent=1 // pred_check_branch
      %74 = sbr.rel (0) target = $region29
    $region28: #{tpu_custom_call.1} parent=1 // pred_region
      %s76 = ssub.s32 16, 16
      %77 = vsyncadd [#allocation5], %s76
      %80 = dma.smem_to_hbm [#allocation8], 16, %s2, [#allocation5]
    $region29: #{tpu_custom_call.1} parent=1 // pred_fallthru
      _
    // Predicated region
    $region30: #{tpu_custom_call.1} parent=1 // pred_check
      _
    $region31: #{tpu_custom_call.1} parent=1 // pred_check_branch
      %82 = sbr.rel (0) target = $region33
    $region32: #{tpu_custom_call.1} parent=1 // pred_region
      %83 = dma.done [#allocation5], 16
    $region33: #{tpu_custom_call.1} parent=1 // pred_fallthru
      _
    %84 = sfence
    %85 = vsyncpa [#allocation4], 1
    %86 = vsyncpa [#allocation7], 1
    %87 = vsyncpa [#allocation5], 1

</llo_original>
